<compile_context>
chip_gen: v6e
topology: v6e:2x2x1
jax: 0.10.0
libtpu: 0.0.40
codegen_flags: <defaults>
</compile_context>

<pallas_src>
import functools

import jax
import jax.numpy as jnp
import numpy as np
from jax.experimental import pallas as pl
from jax.experimental.pallas import tpu as pltpu

_LANE = 128
_SUBLANE = 8


def _round_up(n, m):
    return ((n + m - 1) // m) * m


def _cdiv(a, b):
    return -(-a // b)


def _ff_kernel(x_ref, tc_ref, m_ref,
               w1_ref, b1_ref,
               wtc_ref, bt_ref, bc_ref, csel_ref,
               w2_ref, b2_ref,
               g_ref, beta_ref, lnmask_ref,
               o_ref, *, inv_in_dim, mask_cols, compute_dtype):
    f32 = jnp.float32

    x = x_ref[...].astype(f32)                 # single load; f32 residual
    mask = m_ref[...]                          # (tb, 1) f32 condition mask

    # h = silu(x @ W1 + b1)
    h = jnp.dot(x.astype(compute_dtype), w1_ref[...],
                preferred_element_type=f32) + b1_ref[...]
    h = h * jax.nn.sigmoid(h)

    # Fused timestep + condition branch: silu([t, c]) with the c columns
    # scaled by the per-row mask, one matmul against [Wt; Wc], bias
    # bt + bc * mask.  (silu(c)*mask) @ Wc == (silu(c) @ Wc) * mask.
    tc = tc_ref[...].astype(f32)
    tc = tc * jax.nn.sigmoid(tc)
    csel = csel_ref[...]                       # (1, tc_p): 1.0 on c columns
    tc = tc * ((1.0 - csel) + mask * csel)
    h = (h
         + jnp.dot(tc.astype(compute_dtype), wtc_ref[...],
                   preferred_element_type=f32)
         + bt_ref[...] + bc_ref[...] * mask)

    # Second projection (dropout p=0 -> identity) + residual.
    y = jnp.dot(h.astype(compute_dtype), w2_ref[...],
                preferred_element_type=f32) + b2_ref[...]
    y = y + x

    # LayerNorm over the real in_dim columns.  Padded columns of y are exactly
    # zero (zero-padded W2 columns / b2 / x) -- keep that invariant! -- so the
    # sums are correct with only a resident 0/1 mask on the centered term.
    mean = jnp.sum(y, axis=-1, keepdims=True) * inv_in_dim
    centered = y - mean
    if mask_cols:
        centered = centered * lnmask_ref[...]
    var = jnp.sum(centered * centered, axis=-1, keepdims=True) * inv_in_dim
    y = centered * jax.lax.rsqrt(var + 1e-6)
    o_ref[...] = (y * g_ref[...] + beta_ref[...]).astype(o_ref.dtype)


def _choose_tile_b(B, tile_b, min_tiles):
    """Sublane-aligned batch tile with small padding waste and at least
    `min_tiles` grid iterations (use min_tiles=2 on v7x: 2 TCs/chip)."""
    tb_cap = _round_up(min(max(tile_b, 1), max(B, 1)), _SUBLANE)
    n_tiles = max(min_tiles, _cdiv(B, tb_cap))
    return _round_up(_cdiv(B, n_tiles), _SUBLANE)


def feedforward_pallas(x, timestep, condition, condition_mask, params, *,
                       tile_b=256, compute_dtype=jnp.bfloat16,
                       min_grid_tiles=1, vmem_limit_bytes=None,
                       interpret=False):
    """x: (B, in_dim), timestep: (B, time_dim), condition: (B, cond_dim),
    condition_mask: (B,) -> (B, in_dim).

    compute_dtype: dtype of the MXU operands (bf16 default; pass jnp.float32
    for bit-accurate matmuls).  Accumulation and LayerNorm stats are f32."""
    B, in_dim = x.shape
    time_dim = timestep.shape[-1]
    cond_dim = condition.shape[-1]
    h_dim = params["w1"].shape[-1]

    out_dtype = x.dtype
    if compute_dtype is None:
        compute_dtype = x.dtype

    # Lane-dense padding (feature axes -> multiples of 128).
    in_p = _round_up(in_dim, _LANE)
    h_p = _round_up(h_dim, _LANE)
    t_p = _round_up(time_dim, _LANE)
    c_p = _round_up(cond_dim, _LANE)
    tc_p = t_p + c_p

    tb = _choose_tile_b(B, tile_b, min_grid_tiles)
    B_p = _round_up(B, tb)
    grid = (B_p // tb,)

    def pad2(a, rows, cols, dtype=None):
        a = jnp.asarray(a)
        if a.ndim == 1:
            a = a.reshape(1, -1)
        if dtype is not None:
            a = a.astype(dtype)
        return jnp.pad(a, ((0, rows - a.shape[0]), (0, cols - a.shape[1])))

    # Activations (batch-padded, lane-padded); [t, c] concatenated once.
    x_p = pad2(x, B_p, in_p)
    tc_in = jnp.concatenate(
        [pad2(timestep, B_p, t_p), pad2(condition, B_p, c_p)], axis=1)
    m_p = jnp.pad(condition_mask.astype(jnp.float32).reshape(B, 1),
                  ((0, B_p - B), (0, 0)))

    # Resident weights / biases / LN params (cast once, in the wrapper).
    w1 = pad2(params["w1"], in_p, h_p, compute_dtype)
    w2 = pad2(params["w2"], h_p, in_p, compute_dtype)
    wtc = jnp.zeros((tc_p, h_p), compute_dtype)
    wtc = wtc.at[:time_dim, :h_dim].set(
        jnp.asarray(params["wt"]).astype(compute_dtype))
    wtc = wtc.at[t_p:t_p + cond_dim, :h_dim].set(
        jnp.asarray(params["wc"]).astype(compute_dtype))
    b1 = pad2(params["b1"], 1, h_p, jnp.float32)
    bt = pad2(params["bt"], 1, h_p, jnp.float32)
    bc = pad2(params["bc"], 1, h_p, jnp.float32)
    b2 = pad2(params["b2"], 1, in_p, jnp.float32)
    g = pad2(params["ln_g"], 1, in_p, jnp.float32)
    beta = pad2(params["ln_b"], 1, in_p, jnp.float32)
    # 0/1 selector over the condition columns of the fused [t, c] tile.
    csel = jnp.zeros((1, tc_p), jnp.float32).at[:, t_p:].set(1.0)
    # 0/1 mask over the real in_dim output columns (for LayerNorm).
    lnmask = jnp.zeros((1, in_p), jnp.float32).at[:, :in_dim].set(1.0)

    resident_once = pl.Buffered(1)   # single-buffer constant-index inputs

    def row_spec(cols):
        return pl.BlockSpec((tb, cols), lambda i: (i, 0))

    def const_spec(rows, cols):
        return pl.BlockSpec((rows, cols), lambda i: (0, 0),
                            pipeline_mode=resident_once)

    in_specs = [
        row_spec(in_p),                            # x tile
        row_spec(tc_p),                            # [t, c] tile
        pl.BlockSpec((tb, 1), lambda i: (i, 0)),   # mask tile
        const_spec(in_p, h_p), const_spec(1, h_p),    # W1, b1   (resident)
        const_spec(tc_p, h_p), const_spec(1, h_p),    # [Wt;Wc], bt
        const_spec(1, h_p), const_spec(1, tc_p),      # bc, c-col selector
        const_spec(h_p, in_p), const_spec(1, in_p),   # W2, b2
        const_spec(1, in_p), const_spec(1, in_p),     # gamma, beta
        const_spec(1, in_p),                          # LN column mask
    ]
    out_specs = row_spec(in_p)

    kernel = functools.partial(
        _ff_kernel, inv_in_dim=1.0 / in_dim, mask_cols=(in_p != in_dim),
        compute_dtype=compute_dtype)

    cd_bytes = jnp.dtype(compute_dtype).itemsize
    act_bytes = jnp.dtype(out_dtype).itemsize

    # Explicit VMEM budget: single-buffered resident weights + double-buffered
    # activation tiles + f32 in-kernel temporaries, +25% headroom, capped at
    # 64 MiB (v7x physical per-TC VMEM).
    resident_bytes = ((w1.size + wtc.size + w2.size) * cd_bytes
                      + (b1.size + bt.size + bc.size + b2.size + g.size
                         + beta.size + csel.size + lnmask.size) * 4)
    act_tile_bytes = 2 * tb * ((in_p + tc_p) * act_bytes + 4
                               + in_p * act_bytes)
    interm_bytes = tb * (2 * h_p + 2 * tc_p + 3 * in_p) * 4
    if vmem_limit_bytes is None:
        vmem_limit_bytes = int(1.25 * (resident_bytes + act_tile_bytes
                                       + interm_bytes))
        vmem_limit_bytes = min(max(vmem_limit_bytes, 16 << 20), 64 << 20)

    flops = 2 * B_p * h_p * (in_p + tc_p) + 2 * B_p * h_p * in_p
    transcendentals = B_p * (h_p + tc_p) + B_p       # sigmoids + rsqrt
    bytes_accessed = (
        (x_p.size + tc_in.size) * act_bytes + m_p.size * 4
        + (w1.size + wtc.size + w2.size) * cd_bytes
        + (b1.size + bt.size + bc.size + b2.size + g.size + beta.size
           + csel.size + lnmask.size) * 4
        + B_p * in_p * act_bytes)

    out = pl.pallas_call(
        kernel,
        out_shape=jax.ShapeDtypeStruct((B_p, in_p), out_dtype),
        grid=grid,
        in_specs=in_specs,
        out_specs=out_specs,
        compiler_params=pltpu.CompilerParams(
            dimension_semantics=("parallel",),
            vmem_limit_bytes=int(vmem_limit_bytes)),
        cost_estimate=pl.CostEstimate(
            flops=int(flops),
            transcendentals=int(transcendentals),
            bytes_accessed=int(bytes_accessed)),
        interpret=interpret,
    )(x_p, tc_in, m_p, w1, b1, wtc, bt, bc, csel, w2, b2, g, beta, lnmask)

    return out[:B, :in_dim]


def _init_params(key, in_dim, h_dim, time_dim, cond_dim):
    ks = jax.random.split(key, 4)

    def lin(k, fan_in, fan_out):
        bound = 1.0 / np.sqrt(fan_in)
        kw, kb = jax.random.split(k)
        w = jax.random.uniform(kw, (fan_in, fan_out), jnp.float32, -bound, bound)
        b = jax.random.uniform(kb, (1, fan_out), jnp.float32, -bound, bound)
        return w, b

    w1, b1 = lin(ks[0], in_dim, h_dim)
    w2, b2 = lin(ks[1], h_dim, in_dim)
    wt, bt = lin(ks[2], time_dim, h_dim)
    wc, bc = lin(ks[3], cond_dim, h_dim)
    ln_g = jnp.ones((1, in_dim), jnp.float32)
    ln_b = jnp.zeros((1, in_dim), jnp.float32)
    return dict(w1=w1, b1=b1, w2=w2, b2=b2, wt=wt, bt=bt, wc=wc, bc=bc,
                ln_g=ln_g, ln_b=ln_b)


def _feedforward_ref(x, t, c, m, p):
    silu = jax.nn.silu
    h = silu(x @ p["w1"] + p["b1"])
    temb = silu(t) @ p["wt"] + p["bt"]
    cemb = (silu(c) @ p["wc"] + p["bc"]) * m[:, None]
    h = h + temb + cemb
    y = h @ p["w2"] + p["b2"] + x
    mean = y.mean(-1, keepdims=True)
    var = ((y - mean) ** 2).mean(-1, keepdims=True)
    y = (y - mean) / jnp.sqrt(var + 1e-6)
    return y * p["ln_g"] + p["ln_b"]


if __name__ == "__main__":
    # Small shapes; B=20 + tile_b=8 exercises batch tiling (3 grid steps),
    # resident single-buffered weights, batch padding (20 -> 24 rows), and the
    # fused [t, c] branch with lane padding on every feature axis.
    B, in_dim, h_dim, time_dim, cond_dim = 20, 32, 64, 16, 24

    key = jax.random.PRNGKey(0)
    kx, kt, kc, km, kp = jax.random.split(key, 5)
    x = jax.random.normal(kx, (B, in_dim), jnp.float32)
    timestep = jax.random.normal(kt, (B, time_dim), jnp.float32)
    condition = jax.random.normal(kc, (B, cond_dim), jnp.float32)
    condition_mask = (jax.random.uniform(km, (B,)) > 0.5).astype(jnp.float32)

    params = _init_params(kp, in_dim, h_dim, time_dim, cond_dim)
    ref = _feedforward_ref(x, timestep, condition, condition_mask, params)

    # Default path: bf16 MXU operands, f32 accumulation / LayerNorm stats.
    out_bf16 = feedforward_pallas(x, timestep, condition, condition_mask,
                                  params, tile_b=8)
    out_bf16 = jax.block_until_ready(out_bf16)
    np.testing.assert_allclose(np.asarray(out_bf16), np.asarray(ref),
                               rtol=3e-2, atol=3e-2)

    # f32 operand path (bit-faithful matmuls, tight tolerance).
    out_f32 = feedforward_pallas(x, timestep, condition, condition_mask,
                                 params, tile_b=8, compute_dtype=jnp.float32)
    out_f32 = jax.block_until_ready(out_f32)
    np.testing.assert_allclose(np.asarray(out_f32), np.asarray(ref),
                               rtol=1e-4, atol=1e-4)

    print("KERNEL_OK")
</pallas_src>

<mosaic_0001>
module attributes {stable_mosaic.version = 11 : i64} {
  func.func @_ff_kernel(%arg0: i32, %arg1: memref<8x128xf32, #tpu.memory_space<vmem>>, %arg2: memref<8x256xf32, #tpu.memory_space<vmem>>, %arg3: memref<8x1xf32, #tpu.memory_space<vmem>>, %arg4: memref<128x128xbf16, #tpu.memory_space<vmem>>, %arg5: memref<1x128xf32, #tpu.memory_space<vmem>>, %arg6: memref<256x128xbf16, #tpu.memory_space<vmem>>, %arg7: memref<1x128xf32, #tpu.memory_space<vmem>>, %arg8: memref<1x128xf32, #tpu.memory_space<vmem>>, %arg9: memref<1x256xf32, #tpu.memory_space<vmem>>, %arg10: memref<128x128xbf16, #tpu.memory_space<vmem>>, %arg11: memref<1x128xf32, #tpu.memory_space<vmem>>, %arg12: memref<1x128xf32, #tpu.memory_space<vmem>>, %arg13: memref<1x128xf32, #tpu.memory_space<vmem>>, %arg14: memref<1x128xf32, #tpu.memory_space<vmem>>, %arg15: memref<8x128xf32, #tpu.memory_space<vmem>>) attributes {dimension_semantics = [#tpu.dimension_semantics<parallel>], iteration_bounds = array<i64: 3>, scalar_prefetch = 0 : i64, scratch_operands = 0 : i64, tpu.core_type = #tpu.core_type<tc>, window_params = [{transform_indices = @transform_0, window_bounds = array<i64: 8, 128>}, {transform_indices = @transform_1, window_bounds = array<i64: 8, 256>}, {transform_indices = @transform_2, window_bounds = array<i64: 8, 1>}, {pipeline_mode = #tpu.pipeline_mode<synchronous>, transform_indices = @transform_3, window_bounds = array<i64: 128, 128>}, {pipeline_mode = #tpu.pipeline_mode<synchronous>, transform_indices = @transform_4, window_bounds = array<i64: 1, 128>}, {pipeline_mode = #tpu.pipeline_mode<synchronous>, transform_indices = @transform_5, window_bounds = array<i64: 256, 128>}, {pipeline_mode = #tpu.pipeline_mode<synchronous>, transform_indices = @transform_6, window_bounds = array<i64: 1, 128>}, {pipeline_mode = #tpu.pipeline_mode<synchronous>, transform_indices = @transform_7, window_bounds = array<i64: 1, 128>}, {pipeline_mode = #tpu.pipeline_mode<synchronous>, transform_indices = @transform_8, window_bounds = array<i64: 1, 256>}, {pipeline_mode = #tpu.pipeline_mode<synchronous>, transform_indices = @transform_9, window_bounds = array<i64: 128, 128>}, {pipeline_mode = #tpu.pipeline_mode<synchronous>, transform_indices = @transform_10, window_bounds = array<i64: 1, 128>}, {pipeline_mode = #tpu.pipeline_mode<synchronous>, transform_indices = @transform_11, window_bounds = array<i64: 1, 128>}, {pipeline_mode = #tpu.pipeline_mode<synchronous>, transform_indices = @transform_12, window_bounds = array<i64: 1, 128>}, {pipeline_mode = #tpu.pipeline_mode<synchronous>, transform_indices = @transform_13, window_bounds = array<i64: 1, 128>}, {transform_indices = @transform_14, window_bounds = array<i64: 8, 128>}]} {
    %c0 = arith.constant 0 : index
    %c0_0 = arith.constant 0 : index
    %0 = vector.load %arg1[%c0, %c0_0] : memref<8x128xf32, #tpu.memory_space<vmem>>, vector<8x128xf32>
    %c0_1 = arith.constant 0 : index
    %c0_2 = arith.constant 0 : index
    %1 = vector.load %arg3[%c0_1, %c0_2] : memref<8x1xf32, #tpu.memory_space<vmem>>, vector<8x1xf32>
    %2 = arith.truncf %0 : vector<8x128xf32> to vector<8x128xbf16>
    %c0_3 = arith.constant 0 : index
    %c0_4 = arith.constant 0 : index
    %3 = vector.load %arg4[%c0_3, %c0_4] : memref<128x128xbf16, #tpu.memory_space<vmem>>, vector<128x128xbf16>
    %cst = arith.constant dense<0.000000e+00> : vector<8x128xf32>
    %4 = tpu.matmul %2, %3, %cst {dimension_numbers = #tpu.dot_dimension_numbers<[1], [0], [0], [1], [0, 0, 1, 1], [], []>} : vector<8x128xbf16>, vector<128x128xbf16>, vector<8x128xf32> -> vector<8x128xf32>
    %c0_5 = arith.constant 0 : index
    %c0_6 = arith.constant 0 : index
    %5 = vector.load %arg5[%c0_5, %c0_6] : memref<1x128xf32, #tpu.memory_space<vmem>>, vector<1x128xf32>
    %6 = vector.broadcast %5 : vector<1x128xf32> to vector<8x128xf32>
    %7 = arith.addf %4, %6 : vector<8x128xf32>
    %8 = arith.negf %7 : vector<8x128xf32>
    %9 = math.exp %8 : vector<8x128xf32>
    %cst_7 = arith.constant 1.000000e+00 : f32
    %10 = vector.broadcast %cst_7 : f32 to vector<8x128xf32>
    %11 = arith.addf %10, %9 : vector<8x128xf32>
    %12 = arith.divf %10, %11 : vector<8x128xf32>
    %13 = arith.mulf %7, %12 : vector<8x128xf32>
    %c0_8 = arith.constant 0 : index
    %c0_9 = arith.constant 0 : index
    %14 = vector.load %arg2[%c0_8, %c0_9] : memref<8x256xf32, #tpu.memory_space<vmem>>, vector<8x256xf32>
    %15 = arith.negf %14 : vector<8x256xf32>
    %16 = math.exp %15 : vector<8x256xf32>
    %cst_10 = arith.constant 1.000000e+00 : f32
    %17 = vector.broadcast %cst_10 : f32 to vector<8x256xf32>
    %18 = arith.addf %17, %16 : vector<8x256xf32>
    %19 = arith.divf %17, %18 : vector<8x256xf32>
    %20 = arith.mulf %14, %19 : vector<8x256xf32>
    %c0_11 = arith.constant 0 : index
    %c0_12 = arith.constant 0 : index
    %21 = vector.load %arg9[%c0_11, %c0_12] : memref<1x256xf32, #tpu.memory_space<vmem>>, vector<1x256xf32>
    %cst_13 = arith.constant 1.000000e+00 : f32
    %22 = vector.broadcast %cst_13 : f32 to vector<1x256xf32>
    %23 = arith.subf %22, %21 : vector<1x256xf32>
    %24 = vector.broadcast %1 : vector<8x1xf32> to vector<8x256xf32>
    %25 = vector.broadcast %21 : vector<1x256xf32> to vector<8x256xf32>
    %26 = arith.mulf %24, %25 : vector<8x256xf32>
    %27 = vector.broadcast %23 : vector<1x256xf32> to vector<8x256xf32>
    %28 = arith.addf %27, %26 : vector<8x256xf32>
    %29 = arith.mulf %20, %28 : vector<8x256xf32>
    %30 = arith.truncf %29 : vector<8x256xf32> to vector<8x256xbf16>
    %c0_14 = arith.constant 0 : index
    %c0_15 = arith.constant 0 : index
    %31 = vector.load %arg6[%c0_14, %c0_15] : memref<256x128xbf16, #tpu.memory_space<vmem>>, vector<256x128xbf16>
    %cst_16 = arith.constant dense<0.000000e+00> : vector<8x128xf32>
    %32 = tpu.matmul %30, %31, %cst_16 {dimension_numbers = #tpu.dot_dimension_numbers<[1], [0], [0], [1], [0, 0, 1, 1], [], []>} : vector<8x256xbf16>, vector<256x128xbf16>, vector<8x128xf32> -> vector<8x128xf32>
    %33 = arith.addf %13, %32 : vector<8x128xf32>
    %c0_17 = arith.constant 0 : index
    %c0_18 = arith.constant 0 : index
    %34 = vector.load %arg7[%c0_17, %c0_18] : memref<1x128xf32, #tpu.memory_space<vmem>>, vector<1x128xf32>
    %35 = vector.broadcast %34 : vector<1x128xf32> to vector<8x128xf32>
    %36 = arith.addf %33, %35 : vector<8x128xf32>
    %c0_19 = arith.constant 0 : index
    %c0_20 = arith.constant 0 : index
    %37 = vector.load %arg8[%c0_19, %c0_20] : memref<1x128xf32, #tpu.memory_space<vmem>>, vector<1x128xf32>
    %38 = vector.broadcast %37 : vector<1x128xf32> to vector<8x128xf32>
    %39 = vector.broadcast %1 : vector<8x1xf32> to vector<8x128xf32>
    %40 = arith.mulf %38, %39 : vector<8x128xf32>
    %41 = arith.addf %36, %40 : vector<8x128xf32>
    %42 = arith.truncf %41 : vector<8x128xf32> to vector<8x128xbf16>
    %c0_21 = arith.constant 0 : index
    %c0_22 = arith.constant 0 : index
    %43 = vector.load %arg10[%c0_21, %c0_22] : memref<128x128xbf16, #tpu.memory_space<vmem>>, vector<128x128xbf16>
    %cst_23 = arith.constant dense<0.000000e+00> : vector<8x128xf32>
    %44 = tpu.matmul %42, %43, %cst_23 {dimension_numbers = #tpu.dot_dimension_numbers<[1], [0], [0], [1], [0, 0, 1, 1], [], []>} : vector<8x128xbf16>, vector<128x128xbf16>, vector<8x128xf32> -> vector<8x128xf32>
    %c0_24 = arith.constant 0 : index
    %c0_25 = arith.constant 0 : index
    %45 = vector.load %arg11[%c0_24, %c0_25] : memref<1x128xf32, #tpu.memory_space<vmem>>, vector<1x128xf32>
    %46 = vector.broadcast %45 : vector<1x128xf32> to vector<8x128xf32>
    %47 = arith.addf %44, %46 : vector<8x128xf32>
    %48 = arith.addf %47, %0 : vector<8x128xf32>
    %cst_26 = arith.constant dense<0.000000e+00> : vector<8xf32>
    %49 = vector.multi_reduction <add>, %48, %cst_26 [1] : vector<8x128xf32> to vector<8xf32>
    %50 = vector.shape_cast %49 : vector<8xf32> to vector<8x1xf32>
    %cst_27 = arith.constant 3.125000e-02 : f32
    %51 = vector.broadcast %cst_27 : f32 to vector<8x1xf32>
    %52 = arith.mulf %50, %51 : vector<8x1xf32>
    %53 = vector.broadcast %52 : vector<8x1xf32> to vector<8x128xf32>
    %54 = arith.subf %48, %53 : vector<8x128xf32>
    %c0_28 = arith.constant 0 : index
    %c0_29 = arith.constant 0 : index
    %55 = vector.load %arg14[%c0_28, %c0_29] : memref<1x128xf32, #tpu.memory_space<vmem>>, vector<1x128xf32>
    %56 = vector.broadcast %55 : vector<1x128xf32> to vector<8x128xf32>
    %57 = arith.mulf %54, %56 : vector<8x128xf32>
    %58 = arith.mulf %57, %57 : vector<8x128xf32>
    %cst_30 = arith.constant dense<0.000000e+00> : vector<8xf32>
    %59 = vector.multi_reduction <add>, %58, %cst_30 [1] : vector<8x128xf32> to vector<8xf32>
    %60 = vector.shape_cast %59 : vector<8xf32> to vector<8x1xf32>
    %cst_31 = arith.constant 3.125000e-02 : f32
    %61 = vector.broadcast %cst_31 : f32 to vector<8x1xf32>
    %62 = arith.mulf %60, %61 : vector<8x1xf32>
    %cst_32 = arith.constant 9.99999997E-7 : f32
    %63 = vector.broadcast %cst_32 : f32 to vector<8x1xf32>
    %64 = arith.addf %62, %63 : vector<8x1xf32>
    %65 = math.rsqrt %64 : vector<8x1xf32>
    %66 = vector.broadcast %65 : vector<8x1xf32> to vector<8x128xf32>
    %67 = arith.mulf %57, %66 : vector<8x128xf32>
    %c0_33 = arith.constant 0 : index
    %c0_34 = arith.constant 0 : index
    %68 = vector.load %arg12[%c0_33, %c0_34] : memref<1x128xf32, #tpu.memory_space<vmem>>, vector<1x128xf32>
    %69 = vector.broadcast %68 : vector<1x128xf32> to vector<8x128xf32>
    %70 = arith.mulf %67, %69 : vector<8x128xf32>
    %c0_35 = arith.constant 0 : index
    %c0_36 = arith.constant 0 : index
    %71 = vector.load %arg13[%c0_35, %c0_36] : memref<1x128xf32, #tpu.memory_space<vmem>>, vector<1x128xf32>
    %72 = vector.broadcast %71 : vector<1x128xf32> to vector<8x128xf32>
    %73 = arith.addf %70, %72 : vector<8x128xf32>
    %c0_37 = arith.constant 0 : index
    %c0_38 = arith.constant 0 : index
    %74 = vector.load %arg15[%c0_37, %c0_38] : memref<8x128xf32, #tpu.memory_space<vmem>>, vector<8x128xf32>
    tpu.vector_store %arg15[%c0_37, %c0_38], %73 {strides = array<i32>} : memref<8x128xf32, #tpu.memory_space<vmem>>, vector<8x128xf32>,
    return
  }
  func.func @transform_0(%arg0: i32) -> (i32, i32) {
    %c0_i32 = arith.constant 0 : i32
    %c0_i32_0 = arith.constant 0 : i32
    return %arg0, %c0_i32 : i32, i32
  }
  func.func @transform_1(%arg0: i32) -> (i32, i32) {
    %c0_i32 = arith.constant 0 : i32
    %c0_i32_0 = arith.constant 0 : i32
    return %arg0, %c0_i32 : i32, i32
  }
  func.func @transform_2(%arg0: i32) -> (i32, i32) {
    %c0_i32 = arith.constant 0 : i32
    %c0_i32_0 = arith.constant 0 : i32
    return %arg0, %c0_i32 : i32, i32
  }
  func.func @transform_3(%arg0: i32) -> (i32, i32) {
    %c0_i32 = arith.constant 0 : i32
    %c0_i32_0 = arith.constant 0 : i32
    %c0_i32_1 = arith.constant 0 : i32
    return %c0_i32, %c0_i32_0 : i32, i32
  }
  func.func @transform_4(%arg0: i32) -> (i32, i32) {
    %c0_i32 = arith.constant 0 : i32
    %c0_i32_0 = arith.constant 0 : i32
    %c0_i32_1 = arith.constant 0 : i32
    return %c0_i32, %c0_i32_0 : i32, i32
  }
  func.func @transform_5(%arg0: i32) -> (i32, i32) {
    %c0_i32 = arith.constant 0 : i32
    %c0_i32_0 = arith.constant 0 : i32
    %c0_i32_1 = arith.constant 0 : i32
    return %c0_i32, %c0_i32_0 : i32, i32
  }
  func.func @transform_6(%arg0: i32) -> (i32, i32) {
    %c0_i32 = arith.constant 0 : i32
    %c0_i32_0 = arith.constant 0 : i32
    %c0_i32_1 = arith.constant 0 : i32
    return %c0_i32, %c0_i32_0 : i32, i32
  }
  func.func @transform_7(%arg0: i32) -> (i32, i32) {
    %c0_i32 = arith.constant 0 : i32
    %c0_i32_0 = arith.constant 0 : i32
    %c0_i32_1 = arith.constant 0 : i32
    return %c0_i32, %c0_i32_0 : i32, i32
  }
  func.func @transform_8(%arg0: i32) -> (i32, i32) {
    %c0_i32 = arith.constant 0 : i32
    %c0_i32_0 = arith.constant 0 : i32
    %c0_i32_1 = arith.constant 0 : i32
    return %c0_i32, %c0_i32_0 : i32, i32
  }
  func.func @transform_9(%arg0: i32) -> (i32, i32) {
    %c0_i32 = arith.constant 0 : i32
    %c0_i32_0 = arith.constant 0 : i32
    %c0_i32_1 = arith.constant 0 : i32
    return %c0_i32, %c0_i32_0 : i32, i32
  }
  func.func @transform_10(%arg0: i32) -> (i32, i32) {
    %c0_i32 = arith.constant 0 : i32
    %c0_i32_0 = arith.constant 0 : i32
    %c0_i32_1 = arith.constant 0 : i32
    return %c0_i32, %c0_i32_0 : i32, i32
  }
  func.func @transform_11(%arg0: i32) -> (i32, i32) {
    %c0_i32 = arith.constant 0 : i32
    %c0_i32_0 = arith.constant 0 : i32
    %c0_i32_1 = arith.constant 0 : i32
    return %c0_i32, %c0_i32_0 : i32, i32
  }
  func.func @transform_12(%arg0: i32) -> (i32, i32) {
    %c0_i32 = arith.constant 0 : i32
    %c0_i32_0 = arith.constant 0 : i32
    %c0_i32_1 = arith.constant 0 : i32
    return %c0_i32, %c0_i32_0 : i32, i32
  }
  func.func @transform_13(%arg0: i32) -> (i32, i32) {
    %c0_i32 = arith.constant 0 : i32
    %c0_i32_0 = arith.constant 0 : i32
    %c0_i32_1 = arith.constant 0 : i32
    return %c0_i32, %c0_i32_0 : i32, i32
  }
  func.func @transform_14(%arg0: i32) -> (i32, i32) {
    %c0_i32 = arith.constant 0 : i32
    %c0_i32_0 = arith.constant 0 : i32
    return %arg0, %c0_i32 : i32, i32
  }
}

</mosaic_0001>

<llo_original>
// kernel: tpu_custom_call.1
$region0: #{tpu_custom_call.1}
  #allocation0 [shape = 'u32[]', space=smem, size = 0x4, offset = 0x4, fixed_abs, tag = 'smem constant byte address 0x4 - core index']
  #allocation1 [shape = 'u32[144,128]{1,0:T(1,128)}', space=vmem, size = 0x12000, scoped, tag = 'internal scratch']
  %s0 = inlined_call_operand.vmem [shape: f32[24,128], index: 0, kind: input, shape index: {}]
  %s1 = inlined_call_operand.hbm [shape: f32[24,256], index: 1, kind: input, shape index: {}]
  %s2 = inlined_call_operand.vmem [shape: f32[24,1], index: 2, kind: input, shape index: {}]
  %s3 = inlined_call_operand.hbm [shape: bf16[128,128], index: 3, kind: input, shape index: {}]
  %s4 = inlined_call_operand.vmem [shape: f32[1,128], index: 4, kind: input, shape index: {}]
  %s5 = inlined_call_operand.hbm [shape: bf16[256,128], index: 5, kind: input, shape index: {}]
  %s6 = inlined_call_operand.vmem [shape: f32[1,128], index: 6, kind: input, shape index: {}]
  %s7 = inlined_call_operand.vmem [shape: f32[1,128], index: 7, kind: input, shape index: {}]
  %s8 = inlined_call_operand.vmem [shape: f32[1,256], index: 8, kind: input, shape index: {}]
  %s9 = inlined_call_operand.hbm [shape: bf16[128,128], index: 9, kind: input, shape index: {}]
  %s10 = inlined_call_operand.vmem [shape: f32[1,128], index: 10, kind: input, shape index: {}]
  %s11 = inlined_call_operand.vmem [shape: f32[1,128], index: 11, kind: input, shape index: {}]
  %s12 = inlined_call_operand.vmem [shape: f32[1,128], index: 12, kind: input, shape index: {}]
  %s13 = inlined_call_operand.vmem [shape: f32[1,128], index: 13, kind: input, shape index: {}]
  %s14 = inlined_call_operand.hbm [shape: f32[24,128], index: 14, kind: output, shape index: {}]
  %s15 = sld [smem:[#allocation0]]
  $region105: #{tpu_custom_call.1} parent=0
    _
  %s17 = ssub.s32 1, %s15
  %s18 = scalar_select 0, %s17, %s15
  $region1: #{tpu_custom_call.1} parent=0
    #allocation2 [shape = 'u8[16384]{0}', space=vmem, size = 0x4000, scoped, tag = 'input window, operand 1']
    #allocation3 [shape = 's32[2]{0}', space=sflag, size = 0x8, scoped, tag = 'scoped memory for tpu_custom_call.1']
    #allocation4 [shape = 's32[2]{0}', space=sflag, size = 0x8, scoped, tag = 'scoped memory for tpu_custom_call.1']
    #allocation5 [shape = 'u8[32768]{0}', space=vmem, size = 0x8000, scoped, tag = 'input window, operand 3, single buffered']
    #allocation6 [shape = 's32[1]{0}', space=sflag, size = 0x4, scoped, tag = 'scoped memory for tpu_custom_call.1']
    #allocation7 [shape = 'u8[65536]{0}', space=vmem, size = 0x10000, scoped, tag = 'input window, operand 5, single buffered']
    #allocation8 [shape = 'u8[32768]{0}', space=vmem, size = 0x8000, scoped, tag = 'input window, operand 9, single buffered']
    #allocation9 [shape = 's32[1]{0}', space=sflag, size = 0x4, scoped, tag = 'scoped memory for tpu_custom_call.1']
    #allocation10 [shape = 'u8[8192]{0}', space=vmem, size = 0x2000, scoped, tag = 'output window, operand 0']
    %19 = vsyncpa [#allocation3], 0
    %s20 = scalar_lea.sflag [#allocation3], 1
    %21 = vsyncpa %s20, 0
    %22 = vsyncpa [#allocation6], 0
    %23 = vsyncpa [#allocation9], 0
    %24 = vsyncpa [#allocation4], 0
    %s25 = scalar_lea.sflag [#allocation4], 1
    %26 = vsyncpa %s25, 0
    loop: start=0, step=1, limit=5
    $region2: #{tpu_custom_call.1} parent=1 // loop_pre_header
      _
    $region3: #{tpu_custom_call.1} parent=1 // loop_header
      %s28 = sphi 0, %s32
      %p29 = scmp.ge.s32.totalorder %s28, 5
      %s38 = sphi 0, %s40
      %s41 = sphi 0, %s38
      %s42 = sphi 0, %s41
      %s58 = sphi 0, %s42
      %s64 = sphi 0, %s66
      %s67 = sphi 0, %s64
      %s68 = sphi 0, %s67
      %s84 = sphi 0, %s68
      %s90 = sphi 0, %s92
      %s93 = sphi 0, %s90
      %s94 = sphi 0, %s93
      %s110 = sphi 0, %s94
      %s114 = sphi 0, %s114
      %s116 = sphi 0, %s114
      %s117 = sphi 0, %s116
      %s131 = sphi 0, %s117
      %s135 = sphi 0, %s135
      %s137 = sphi 0, %s135
      %s138 = sphi 0, %s137
      %s152 = sphi 0, %s138
      %s156 = sphi 0, %s156
      %s158 = sphi 0, %s156
      %s159 = sphi 0, %s158
      %s173 = sphi 0, %s159
      %s177 = sphi 0, %s177
      %s179 = sphi 0, %s177
      %s180 = sphi 0, %s179
      %s194 = sphi 0, %s180
      %s198 = sphi 0, %s198
      %s200 = sphi 0, %s198
      %s201 = sphi 0, %s200
      %s215 = sphi 0, %s201
      %s219 = sphi 0, %s219
      %s221 = sphi 0, %s219
      %s222 = sphi 0, %s221
      %s236 = sphi 0, %s222
      %s240 = sphi 0, %s240
      %s242 = sphi 0, %s240
      %s243 = sphi 0, %s242
      %s257 = sphi 0, %s243
      %s261 = sphi 0, %s261
      %s263 = sphi 0, %s261
      %s264 = sphi 0, %s263
      %s278 = sphi 0, %s264
      %s282 = sphi 0, %s282
      %s284 = sphi 0, %s282
      %s285 = sphi 0, %s284
      %s299 = sphi 0, %s285
      %s303 = sphi 0, %s303
      %s305 = sphi 0, %s303
      %s306 = sphi 0, %s305
      %s320 = sphi 0, %s306
      %s324 = sphi 0, %s324
      %s326 = sphi 0, %s324
      %s327 = sphi 0, %s326
      %s341 = sphi 0, %s327
      %s347 = sphi 0, %s349
      %s350 = sphi 0, %s347
      %s351 = sphi 0, %s350
      %s367 = sphi 0, %s351
    $region4: #{tpu_custom_call.1} parent=1 // loop_header_branch
      %31 = sbr.rel (%p29) target = $region8
    $region5: #{tpu_custom_call.1} parent=1 // loop_body
      %s33 = ssub.s32 %s28, 1
      %s34 = ssub.s32 %s28, 2
      %s35 = sadd.s32 %s28, 1
      %s36 = ssub.s32 %s28, %s35
      %p37 = scmp.eq.s32.totalorder %s36, 0
      %s39 = sadd.s32 %s38, 1
      %s40 = scalar_select %p37, %s38, %s39
      %p43 = pneg %p37
      %p44 = scmp.eq.s32.totalorder %s28, 2
      %p45 = por %p43, %p44
      %p46 = scmp.ne.s32.totalorder %s38, %s41
      %p47 = scmp.eq.s32.totalorder %s28, 0
      %p48 = por %p46, %p47
      %p49 = scmp.ne.s32.totalorder %s38, %s41
      %p50 = scmp.eq.s32.totalorder %s33, 2
      %p51 = por %p49, %p50
      %p52 = scmp.ne.s32.totalorder %s41, %s42
      %p53 = scmp.eq.s32.totalorder %s33, 0
      %p54 = por %p52, %p53
      %p55 = scmp.ne.s32.totalorder %s41, %s42
      %p56 = scmp.eq.s32.totalorder %s34, 2
      %p57 = por %p55, %p56
      %p59 = scmp.ne.s32.totalorder %s42, %s58
      %p60 = scmp.eq.s32.totalorder %s34, 0
      %p61 = por %p59, %p60
      %s62 = ssub.s32 %s28, %s35
      %p63 = scmp.eq.s32.totalorder %s62, 0
      %s65 = sadd.s32 %s64, 1
      %s66 = scalar_select %p63, %s64, %s65
      %p69 = pneg %p63
      %p70 = scmp.eq.s32.totalorder %s28, 2
      %p71 = por %p69, %p70
      %p72 = scmp.ne.s32.totalorder %s64, %s67
      %p73 = scmp.eq.s32.totalorder %s28, 0
      %p74 = por %p72, %p73
      %p75 = scmp.ne.s32.totalorder %s64, %s67
      %p76 = scmp.eq.s32.totalorder %s33, 2
      %p77 = por %p75, %p76
      %p78 = scmp.ne.s32.totalorder %s67, %s68
      %p79 = scmp.eq.s32.totalorder %s33, 0
      %p80 = por %p78, %p79
      %p81 = scmp.ne.s32.totalorder %s67, %s68
      %p82 = scmp.eq.s32.totalorder %s34, 2
      %p83 = por %p81, %p82
      %p85 = scmp.ne.s32.totalorder %s68, %s84
      %p86 = scmp.eq.s32.totalorder %s34, 0
      %p87 = por %p85, %p86
      %s88 = ssub.s32 %s28, %s35
      %p89 = scmp.eq.s32.totalorder %s88, 0
      %s91 = sadd.s32 %s90, 1
      %s92 = scalar_select %p89, %s90, %s91
      %p95 = pneg %p89
      %p96 = scmp.eq.s32.totalorder %s28, 2
      %p97 = por %p95, %p96
      %p98 = scmp.ne.s32.totalorder %s90, %s93
      %p99 = scmp.eq.s32.totalorder %s28, 0
      %p100 = por %p98, %p99
      %p101 = scmp.ne.s32.totalorder %s90, %s93
      %p102 = scmp.eq.s32.totalorder %s33, 2
      %p103 = por %p101, %p102
      %p104 = scmp.ne.s32.totalorder %s93, %s94
      %p105 = scmp.eq.s32.totalorder %s33, 0
      %p106 = por %p104, %p105
      %p107 = scmp.ne.s32.totalorder %s93, %s94
      %p108 = scmp.eq.s32.totalorder %s34, 2
      %p109 = por %p107, %p108
      %p111 = scmp.ne.s32.totalorder %s94, %s110
      %p112 = scmp.eq.s32.totalorder %s34, 0
      %p113 = por %p111, %p112
      %s115 = sadd.s32 %s114, 1
      %p118 = scmp.eq.s32.totalorder %s28, 2
      %p119 = scmp.ne.s32.totalorder %s114, %s116
      %p120 = scmp.eq.s32.totalorder %s28, 0
      %p121 = por %p119, %p120
      %p122 = scmp.ne.s32.totalorder %s114, %s116
      %p123 = scmp.eq.s32.totalorder %s33, 2
      %p124 = por %p122, %p123
      %p125 = scmp.ne.s32.totalorder %s116, %s117
      %p126 = scmp.eq.s32.totalorder %s33, 0
      %p127 = por %p125, %p126
      %p128 = scmp.ne.s32.totalorder %s116, %s117
      %p129 = scmp.eq.s32.totalorder %s34, 2
      %p130 = por %p128, %p129
      %p132 = scmp.ne.s32.totalorder %s117, %s131
      %p133 = scmp.eq.s32.totalorder %s34, 0
      %p134 = por %p132, %p133
      %s136 = sadd.s32 %s135, 1
      %p139 = scmp.eq.s32.totalorder %s28, 2
      %p140 = scmp.ne.s32.totalorder %s135, %s137
      %p141 = scmp.eq.s32.totalorder %s28, 0
      %p142 = por %p140, %p141
      %p143 = scmp.ne.s32.totalorder %s135, %s137
      %p144 = scmp.eq.s32.totalorder %s33, 2
      %p145 = por %p143, %p144
      %p146 = scmp.ne.s32.totalorder %s137, %s138
      %p147 = scmp.eq.s32.totalorder %s33, 0
      %p148 = por %p146, %p147
      %p149 = scmp.ne.s32.totalorder %s137, %s138
      %p150 = scmp.eq.s32.totalorder %s34, 2
      %p151 = por %p149, %p150
      %p153 = scmp.ne.s32.totalorder %s138, %s152
      %p154 = scmp.eq.s32.totalorder %s34, 0
      %p155 = por %p153, %p154
      %s157 = sadd.s32 %s156, 1
      %p160 = scmp.eq.s32.totalorder %s28, 2
      %p161 = scmp.ne.s32.totalorder %s156, %s158
      %p162 = scmp.eq.s32.totalorder %s28, 0
      %p163 = por %p161, %p162
      %p164 = scmp.ne.s32.totalorder %s156, %s158
      %p165 = scmp.eq.s32.totalorder %s33, 2
      %p166 = por %p164, %p165
      %p167 = scmp.ne.s32.totalorder %s158, %s159
      %p168 = scmp.eq.s32.totalorder %s33, 0
      %p169 = por %p167, %p168
      %p170 = scmp.ne.s32.totalorder %s158, %s159
      %p171 = scmp.eq.s32.totalorder %s34, 2
      %p172 = por %p170, %p171
      %p174 = scmp.ne.s32.totalorder %s159, %s173
      %p175 = scmp.eq.s32.totalorder %s34, 0
      %p176 = por %p174, %p175
      %s178 = sadd.s32 %s177, 1
      %p181 = scmp.eq.s32.totalorder %s28, 2
      %p182 = scmp.ne.s32.totalorder %s177, %s179
      %p183 = scmp.eq.s32.totalorder %s28, 0
      %p184 = por %p182, %p183
      %p185 = scmp.ne.s32.totalorder %s177, %s179
      %p186 = scmp.eq.s32.totalorder %s33, 2
      %p187 = por %p185, %p186
      %p188 = scmp.ne.s32.totalorder %s179, %s180
      %p189 = scmp.eq.s32.totalorder %s33, 0
      %p190 = por %p188, %p189
      %p191 = scmp.ne.s32.totalorder %s179, %s180
      %p192 = scmp.eq.s32.totalorder %s34, 2
      %p193 = por %p191, %p192
      %p195 = scmp.ne.s32.totalorder %s180, %s194
      %p196 = scmp.eq.s32.totalorder %s34, 0
      %p197 = por %p195, %p196
      %s199 = sadd.s32 %s198, 1
      %p202 = scmp.eq.s32.totalorder %s28, 2
      %p203 = scmp.ne.s32.totalorder %s198, %s200
      %p204 = scmp.eq.s32.totalorder %s28, 0
      %p205 = por %p203, %p204
      %p206 = scmp.ne.s32.totalorder %s198, %s200
      %p207 = scmp.eq.s32.totalorder %s33, 2
      %p208 = por %p206, %p207
      %p209 = scmp.ne.s32.totalorder %s200, %s201
      %p210 = scmp.eq.s32.totalorder %s33, 0
      %p211 = por %p209, %p210
      %p212 = scmp.ne.s32.totalorder %s200, %s201
      %p213 = scmp.eq.s32.totalorder %s34, 2
      %p214 = por %p212, %p213
      %p216 = scmp.ne.s32.totalorder %s201, %s215
      %p217 = scmp.eq.s32.totalorder %s34, 0
      %p218 = por %p216, %p217
      %s220 = sadd.s32 %s219, 1
      %p223 = scmp.eq.s32.totalorder %s28, 2
      %p224 = scmp.ne.s32.totalorder %s219, %s221
      %p225 = scmp.eq.s32.totalorder %s28, 0
      %p226 = por %p224, %p225
      %p227 = scmp.ne.s32.totalorder %s219, %s221
      %p228 = scmp.eq.s32.totalorder %s33, 2
      %p229 = por %p227, %p228
      %p230 = scmp.ne.s32.totalorder %s221, %s222
      %p231 = scmp.eq.s32.totalorder %s33, 0
      %p232 = por %p230, %p231
      %p233 = scmp.ne.s32.totalorder %s221, %s222
      %p234 = scmp.eq.s32.totalorder %s34, 2
      %p235 = por %p233, %p234
      %p237 = scmp.ne.s32.totalorder %s222, %s236
      %p238 = scmp.eq.s32.totalorder %s34, 0
      %p239 = por %p237, %p238
      %s241 = sadd.s32 %s240, 1
      %p244 = scmp.eq.s32.totalorder %s28, 2
      %p245 = scmp.ne.s32.totalorder %s240, %s242
      %p246 = scmp.eq.s32.totalorder %s28, 0
      %p247 = por %p245, %p246
      %p248 = scmp.ne.s32.totalorder %s240, %s242
      %p249 = scmp.eq.s32.totalorder %s33, 2
      %p250 = por %p248, %p249
      %p251 = scmp.ne.s32.totalorder %s242, %s243
      %p252 = scmp.eq.s32.totalorder %s33, 0
      %p253 = por %p251, %p252
      %p254 = scmp.ne.s32.totalorder %s242, %s243
      %p255 = scmp.eq.s32.totalorder %s34, 2
      %p256 = por %p254, %p255
      %p258 = scmp.ne.s32.totalorder %s243, %s257
      %p259 = scmp.eq.s32.totalorder %s34, 0
      %p260 = por %p258, %p259
      %s262 = sadd.s32 %s261, 1
      %p265 = scmp.eq.s32.totalorder %s28, 2
      %p266 = scmp.ne.s32.totalorder %s261, %s263
      %p267 = scmp.eq.s32.totalorder %s28, 0
      %p268 = por %p266, %p267
      %p269 = scmp.ne.s32.totalorder %s261, %s263
      %p270 = scmp.eq.s32.totalorder %s33, 2
      %p271 = por %p269, %p270
      %p272 = scmp.ne.s32.totalorder %s263, %s264
      %p273 = scmp.eq.s32.totalorder %s33, 0
      %p274 = por %p272, %p273
      %p275 = scmp.ne.s32.totalorder %s263, %s264
      %p276 = scmp.eq.s32.totalorder %s34, 2
      %p277 = por %p275, %p276
      %p279 = scmp.ne.s32.totalorder %s264, %s278
      %p280 = scmp.eq.s32.totalorder %s34, 0
      %p281 = por %p279, %p280
      %s283 = sadd.s32 %s282, 1
      %p286 = scmp.eq.s32.totalorder %s28, 2
      %p287 = scmp.ne.s32.totalorder %s282, %s284
      %p288 = scmp.eq.s32.totalorder %s28, 0
      %p289 = por %p287, %p288
      %p290 = scmp.ne.s32.totalorder %s282, %s284
      %p291 = scmp.eq.s32.totalorder %s33, 2
      %p292 = por %p290, %p291
      %p293 = scmp.ne.s32.totalorder %s284, %s285
      %p294 = scmp.eq.s32.totalorder %s33, 0
      %p295 = por %p293, %p294
      %p296 = scmp.ne.s32.totalorder %s284, %s285
      %p297 = scmp.eq.s32.totalorder %s34, 2
      %p298 = por %p296, %p297
      %p300 = scmp.ne.s32.totalorder %s285, %s299
      %p301 = scmp.eq.s32.totalorder %s34, 0
      %p302 = por %p300, %p301
      %s304 = sadd.s32 %s303, 1
      %p307 = scmp.eq.s32.totalorder %s28, 2
      %p308 = scmp.ne.s32.totalorder %s303, %s305
      %p309 = scmp.eq.s32.totalorder %s28, 0
      %p310 = por %p308, %p309
      %p311 = scmp.ne.s32.totalorder %s303, %s305
      %p312 = scmp.eq.s32.totalorder %s33, 2
      %p313 = por %p311, %p312
      %p314 = scmp.ne.s32.totalorder %s305, %s306
      %p315 = scmp.eq.s32.totalorder %s33, 0
      %p316 = por %p314, %p315
      %p317 = scmp.ne.s32.totalorder %s305, %s306
      %p318 = scmp.eq.s32.totalorder %s34, 2
      %p319 = por %p317, %p318
      %p321 = scmp.ne.s32.totalorder %s306, %s320
      %p322 = scmp.eq.s32.totalorder %s34, 0
      %p323 = por %p321, %p322
      %s325 = sadd.s32 %s324, 1
      %p328 = scmp.eq.s32.totalorder %s28, 2
      %p329 = scmp.ne.s32.totalorder %s324, %s326
      %p330 = scmp.eq.s32.totalorder %s28, 0
      %p331 = por %p329, %p330
      %p332 = scmp.ne.s32.totalorder %s324, %s326
      %p333 = scmp.eq.s32.totalorder %s33, 2
      %p334 = por %p332, %p333
      %p335 = scmp.ne.s32.totalorder %s326, %s327
      %p336 = scmp.eq.s32.totalorder %s33, 0
      %p337 = por %p335, %p336
      %p338 = scmp.ne.s32.totalorder %s326, %s327
      %p339 = scmp.eq.s32.totalorder %s34, 2
      %p340 = por %p338, %p339
      %p342 = scmp.ne.s32.totalorder %s327, %s341
      %p343 = scmp.eq.s32.totalorder %s34, 0
      %p344 = por %p342, %p343
      %s345 = ssub.s32 %s28, %s35
      %p346 = scmp.eq.s32.totalorder %s345, 0
      %s348 = sadd.s32 %s347, 1
      %s349 = scalar_select %p346, %s347, %s348
      %p352 = pneg %p346
      %p353 = scmp.eq.s32.totalorder %s28, 2
      %p354 = por %p352, %p353
      %p355 = scmp.ne.s32.totalorder %s347, %s350
      %p356 = scmp.eq.s32.totalorder %s28, 0
      %p357 = por %p355, %p356
      %p358 = scmp.ne.s32.totalorder %s347, %s350
      %p359 = scmp.eq.s32.totalorder %s33, 2
      %p360 = por %p358, %p359
      %p361 = scmp.ne.s32.totalorder %s350, %s351
      %p362 = scmp.eq.s32.totalorder %s33, 0
      %p363 = por %p361, %p362
      %p364 = scmp.ne.s32.totalorder %s350, %s351
      %p365 = scmp.eq.s32.totalorder %s34, 2
      %p366 = por %p364, %p365
      %p368 = scmp.ne.s32.totalorder %s351, %s367
      %p369 = scmp.eq.s32.totalorder %s34, 0
      %p370 = por %p368, %p369
      %p371 = scmp.le.s32.totalorder 1, %s28
      %p372 = scmp.lt.s32.totalorder %s28, 4
      %p373 = pnand %p371, %p372
      %p374 = pneg %p373
      // Predicated region
      $region9: #{tpu_custom_call.1} parent=5 // pred_check
        _
      $region10: #{tpu_custom_call.1} parent=5 // pred_check_branch
        %376 = sbr.rel (%p373) target = $region12
      $region11: #{tpu_custom_call.1} parent=5 // pred_region
        %s377 = ssub.s32 %s28, 1
        // Predicated region
        $region13: #{tpu_custom_call.1} parent=11 // pred_check
          %p378 = pneg %p127
        $region14: #{tpu_custom_call.1} parent=11 // pred_check_branch
          %380 = sbr.rel (%p378) target = $region16
        $region15: #{tpu_custom_call.1} parent=11 // pred_region
          %s382 = ssub.s32 1024, 1024
          %383 = vsyncadd [#allocation6], %s382
          %s384 = sshll.u32 [#allocation5], 4
          %s385 = int_to_ptr.vmem [resolvable:$true] %s384
          %390 = dma.hbm_to_vmem [thread:$0]  %s3, 1024, %s385, [#allocation6], 64, 64, 4
        $region16: #{tpu_custom_call.1} parent=11 // pred_fallthru
          _
        // Predicated region
        $region17: #{tpu_custom_call.1} parent=11 // pred_check
          %p391 = pneg %p148
        $region18: #{tpu_custom_call.1} parent=11 // pred_check_branch
          %393 = sbr.rel (%p391) target = $region20
        $region19: #{tpu_custom_call.1} parent=11 // pred_region
          _
        $region20: #{tpu_custom_call.1} parent=11 // pred_fallthru
          _
        // Predicated region
        $region21: #{tpu_custom_call.1} parent=11 // pred_check
          %p394 = pneg %p169
        $region22: #{tpu_custom_call.1} parent=11 // pred_check_branch
          %396 = sbr.rel (%p394) target = $region24
        $region23: #{tpu_custom_call.1} parent=11 // pred_region
          %s398 = ssub.s32 2048, 2048
          %399 = vsyncadd [#allocation6], %s398
          %s400 = sshll.u32 [#allocation7], 4
          %s401 = int_to_ptr.vmem [resolvable:$true] %s400
          %406 = dma.hbm_to_vmem [thread:$0]  %s5, 2048, %s401, [#allocation6], 64, 64, 4
        $region24: #{tpu_custom_call.1} parent=11 // pred_fallthru
          _
        // Predicated region
        $region25: #{tpu_custom_call.1} parent=11 // pred_check
          %p407 = pneg %p190
        $region26: #{tpu_custom_call.1} parent=11 // pred_check_branch
          %409 = sbr.rel (%p407) target = $region28
        $region27: #{tpu_custom_call.1} parent=11 // pred_region
          _
        $region28: #{tpu_custom_call.1} parent=11 // pred_fallthru
          _
        // Predicated region
        $region29: #{tpu_custom_call.1} parent=11 // pred_check
          %p410 = pneg %p211
        $region30: #{tpu_custom_call.1} parent=11 // pred_check_branch
          %412 = sbr.rel (%p410) target = $region32
        $region31: #{tpu_custom_call.1} parent=11 // pred_region
          _
        $region32: #{tpu_custom_call.1} parent=11 // pred_fallthru
          _
        // Predicated region
        $region33: #{tpu_custom_call.1} parent=11 // pred_check
          %p413 = pneg %p232
        $region34: #{tpu_custom_call.1} parent=11 // pred_check_branch
          %415 = sbr.rel (%p413) target = $region36
        $region35: #{tpu_custom_call.1} parent=11 // pred_region
          _
        $region36: #{tpu_custom_call.1} parent=11 // pred_fallthru
          _
        // Predicated region
        $region37: #{tpu_custom_call.1} parent=11 // pred_check
          %p416 = pneg %p253
        $region38: #{tpu_custom_call.1} parent=11 // pred_check_branch
          %418 = sbr.rel (%p416) target = $region40
        $region39: #{tpu_custom_call.1} parent=11 // pred_region
          %s420 = ssub.s32 1024, 1024
          %421 = vsyncadd [#allocation9], %s420
          %s422 = sshll.u32 [#allocation8], 4
          %s423 = int_to_ptr.vmem [resolvable:$true] %s422
          %428 = dma.hbm_to_vmem [thread:$0]  %s9, 1024, %s423, [#allocation9], 64, 64, 4
        $region40: #{tpu_custom_call.1} parent=11 // pred_fallthru
          _
        // Predicated region
        $region41: #{tpu_custom_call.1} parent=11 // pred_check
          %p429 = pneg %p274
        $region42: #{tpu_custom_call.1} parent=11 // pred_check_branch
          %431 = sbr.rel (%p429) target = $region44
        $region43: #{tpu_custom_call.1} parent=11 // pred_region
          _
        $region44: #{tpu_custom_call.1} parent=11 // pred_fallthru
          _
        // Predicated region
        $region45: #{tpu_custom_call.1} parent=11 // pred_check
          %p432 = pneg %p295
        $region46: #{tpu_custom_call.1} parent=11 // pred_check_branch
          %434 = sbr.rel (%p432) target = $region48
        $region47: #{tpu_custom_call.1} parent=11 // pred_region
          _
        $region48: #{tpu_custom_call.1} parent=11 // pred_fallthru
          _
        // Predicated region
        $region49: #{tpu_custom_call.1} parent=11 // pred_check
          %p435 = pneg %p316
        $region50: #{tpu_custom_call.1} parent=11 // pred_check_branch
          %437 = sbr.rel (%p435) target = $region52
        $region51: #{tpu_custom_call.1} parent=11 // pred_region
          _
        $region52: #{tpu_custom_call.1} parent=11 // pred_fallthru
          _
        // Predicated region
        $region53: #{tpu_custom_call.1} parent=11 // pred_check
          %p438 = pneg %p337
        $region54: #{tpu_custom_call.1} parent=11 // pred_check_branch
          %440 = sbr.rel (%p438) target = $region56
        $region55: #{tpu_custom_call.1} parent=11 // pred_region
          _
        $region56: #{tpu_custom_call.1} parent=11 // pred_fallthru
          _
      $region12: #{tpu_custom_call.1} parent=5 // pred_fallthru
        _
      %p441 = scmp.lt.s32.totalorder %s28, 3
      // Predicated region
      $region57: #{tpu_custom_call.1} parent=5 // pred_check
        %p442 = pneg %p441
      $region58: #{tpu_custom_call.1} parent=5 // pred_check_branch
        %444 = sbr.rel (%p442) target = $region60
      $region59: #{tpu_custom_call.1} parent=5 // pred_region
        // Predicated region
        $region61: #{tpu_custom_call.1} parent=59 // pred_check
          %p445 = pneg %p48
        $region62: #{tpu_custom_call.1} parent=59 // pred_check_branch
          %447 = sbr.rel (%p445) target = $region64
        $region63: #{tpu_custom_call.1} parent=59 // pred_region
          %p448 = scmp.lt.s32.totalorder %s28, 2
          %s449 = scalar_select %p448, %s28, 2
          %s450 = smul.addr %s449, 8
          %s451 = scalar_lea.vmem %s0, %s450
        $region64: #{tpu_custom_call.1} parent=59 // pred_fallthru
          _
        // Predicated region
        $region65: #{tpu_custom_call.1} parent=59 // pred_check
          %p452 = pneg %p74
        $region66: #{tpu_custom_call.1} parent=59 // pred_check_branch
          %454 = sbr.rel (%p452) target = $region68
        $region67: #{tpu_custom_call.1} parent=59 // pred_region
          %s455 = sand.u32 %s64, 1
          %s456 = scalar_lea.sflag [#allocation3], %s455
          %s457 = sand.u32 %s64, 1
          %s458 = smul.addr %s457, 16
          %s459 = scalar_lea.vmem [#allocation2], %s458
          %s461 = ssub.s32 256, 256
          %462 = vsyncadd %s456, %s461
          %s463 = smul.addr %s28, 2
          %s464 = smul.addr %s463, 128
          %s465 = scalar_lea.hbm %s1, %s464
          %s467 = sshll.u32 %s459, 4
          %s468 = int_to_ptr.vmem [resolvable:$true] %s467
          %470 = dma.hbm_to_vmem [thread:$0]  %s465, 256, %s468, %s456
        $region68: #{tpu_custom_call.1} parent=59 // pred_fallthru
          _
        // Predicated region
        $region69: #{tpu_custom_call.1} parent=59 // pred_check
          %p471 = pneg %p100
        $region70: #{tpu_custom_call.1} parent=59 // pred_check_branch
          %473 = sbr.rel (%p471) target = $region72
        $region71: #{tpu_custom_call.1} parent=59 // pred_region
          %p474 = scmp.lt.s32.totalorder %s28, 2
          %s475 = scalar_select %p474, %s28, 2
          %s476 = smul.addr %s475, 8
          %s477 = scalar_lea.vmem %s2, %s476
        $region72: #{tpu_custom_call.1} parent=59 // pred_fallthru
          _
      $region60: #{tpu_custom_call.1} parent=5 // pred_fallthru
        _
      %p478 = scmp.le.s32.totalorder 1, %s28
      %p479 = scmp.lt.s32.totalorder %s28, 4
      %p480 = pnand %p478, %p479
      %p481 = pneg %p480
      // Predicated region
      $region73: #{tpu_custom_call.1} parent=5 // pred_check
        _
      $region74: #{tpu_custom_call.1} parent=5 // pred_check_branch
        %483 = sbr.rel (%p480) target = $region76
      $region75: #{tpu_custom_call.1} parent=5 // pred_region
        %s484 = ssub.s32 %s28, 1
        %s485 = sand.u32 %s67, 1
        %s486 = scalar_lea.sflag [#allocation3], %s485
        %s487 = sand.u32 %s67, 1
        %s488 = smul.addr %s487, 16
        %s489 = scalar_lea.vmem [#allocation2], %s488
        // Predicated region
        $region77: #{tpu_custom_call.1} parent=75 // pred_check
          %p490 = pneg %p80
        $region78: #{tpu_custom_call.1} parent=75 // pred_check_branch
          %492 = sbr.rel (%p490) target = $region80
        $region79: #{tpu_custom_call.1} parent=75 // pred_region
          %493 = dma.done %s486, 256
        $region80: #{tpu_custom_call.1} parent=75 // pred_fallthru
          _
        // Predicated region
        $region81: #{tpu_custom_call.1} parent=75 // pred_check
          %p494 = pneg %p127
        $region82: #{tpu_custom_call.1} parent=75 // pred_check_branch
          %496 = sbr.rel (%p494) target = $region84
        $region83: #{tpu_custom_call.1} parent=75 // pred_region
          %497 = dma.done [#allocation6], 1024
        $region84: #{tpu_custom_call.1} parent=75 // pred_fallthru
          _
        // Predicated region
        $region85: #{tpu_custom_call.1} parent=75 // pred_check
          %p498 = pneg %p169
        $region86: #{tpu_custom_call.1} parent=75 // pred_check_branch
          %500 = sbr.rel (%p498) target = $region88
        $region87: #{tpu_custom_call.1} parent=75 // pred_region
          %501 = dma.done [#allocation6], 2048
        $region88: #{tpu_custom_call.1} parent=75 // pred_fallthru
          _
        // Predicated region
        $region89: #{tpu_custom_call.1} parent=75 // pred_check
          %p502 = pneg %p253
        $region90: #{tpu_custom_call.1} parent=75 // pred_check_branch
          %504 = sbr.rel (%p502) target = $region92
        $region91: #{tpu_custom_call.1} parent=75 // pred_region
          %505 = dma.done [#allocation9], 1024
        $region92: #{tpu_custom_call.1} parent=75 // pred_fallthru
          _
        %p506 = scmp.lt.s32.totalorder %s33, 2
        %s507 = scalar_select %p506, %s33, 2
        %s508 = smul.addr %s507, 8
        %s509 = scalar_lea.vmem %s0, %s508
        %p510 = pneg %p54
        %p511 = pneg %p51
        %s512 = sand.u32 %s67, 1
        %s513 = scalar_lea.sflag [#allocation3], %s512
        %s514 = sand.u32 %s67, 1
        %s515 = smul.addr %s514, 16
        %s516 = scalar_lea.vmem [#allocation2], %s515
        %p517 = pneg %p80
        %p518 = pneg %p77
        %p519 = scmp.lt.s32.totalorder %s33, 2
        %s520 = scalar_select %p519, %s33, 2
        %s521 = smul.addr %s520, 8
        %s522 = scalar_lea.vmem %s2, %s521
        %p523 = pneg %p106
        %p524 = pneg %p103
        %p525 = pneg %p127
        %p526 = pneg %p124
        %p527 = pneg %p148
        %p528 = pneg %p145
        %p529 = pneg %p169
        %p530 = pneg %p166
        %p531 = pneg %p190
        %p532 = pneg %p187
        %p533 = pneg %p211
        %p534 = pneg %p208
        %p535 = pneg %p232
        %p536 = pneg %p229
        %p537 = pneg %p253
        %p538 = pneg %p250
        %p539 = pneg %p274
        %p540 = pneg %p271
        %p541 = pneg %p295
        %p542 = pneg %p292
        %p543 = pneg %p316
        %p544 = pneg %p313
        %p545 = pneg %p337
        %p546 = pneg %p334
        %p547 = pneg %p363
        %p548 = pneg %p360
        %s549 = sand.u32 %s350, 1
        %s550 = scalar_lea.sflag [#allocation4], %s549
        %s551 = sand.u32 %s350, 1
        %s552 = smul.addr %s551, 8
        %s553 = scalar_lea.vmem [#allocation10], %s552
        %p554 = scmp.lt.s32.totalorder %s33, 2
        %s555 = scalar_select %p554, %s33, 2
        %s556 = smul.addr %s555, 8
        %s557 = scalar_lea.vmem %s0, %s556
        %p558 = scmp.lt.s32.totalorder %s33, 2
        %s559 = scalar_select %p558, %s33, 2
        %s560 = smul.addr %s559, 8
        %s561 = scalar_lea.vmem %s2, %s560
        %v563 = vld [vmem:[%s557] sm:$0xff]
        %v564 = vld [vmem:[%s561] sm:$0xff]
        %v565 = vpack.c.bf16 %v563, %v563
        %v566 = vld [vmem:[#allocation5] sm:$0xf]
        %v567 = vld [vmem:[#allocation5 + $0x4] sm:$0xf]
        %v568 = vld [vmem:[#allocation5 + $0x8] sm:$0xf]
        %v569 = vld [vmem:[#allocation5 + $0xc] sm:$0xf]
        %v570 = vld [vmem:[#allocation5 + $0x10] sm:$0xf]
        %v571 = vld [vmem:[#allocation5 + $0x14] sm:$0xf]
        %v572 = vld [vmem:[#allocation5 + $0x18] sm:$0xf]
        %v573 = vld [vmem:[#allocation5 + $0x1c] sm:$0xf]
        %v574 = vld [vmem:[#allocation5 + $0x20] sm:$0xf]
        %v575 = vld [vmem:[#allocation5 + $0x24] sm:$0xf]
        %v576 = vld [vmem:[#allocation5 + $0x28] sm:$0xf]
        %v577 = vld [vmem:[#allocation5 + $0x2c] sm:$0xf]
        %v578 = vld [vmem:[#allocation5 + $0x30] sm:$0xf]
        %v579 = vld [vmem:[#allocation5 + $0x34] sm:$0xf]
        %v580 = vld [vmem:[#allocation5 + $0x38] sm:$0xf]
        %v581 = vld [vmem:[#allocation5 + $0x3c] sm:$0xf]
        %v582 = vld [vmem:[%s4] sm:$0x1]
        %v584 = vlaneseq
        %v585 = vshrl.u32 %v584, 7
        %v586 = vsub.s32 0, %v585
        %v587 = vrot.slane %v582, %v586
        %v605 = vunpack.c.l.b16 %v566
        %v606 = vunpack.c.l.b16 %v567
        %v607 = vunpack.c.l.b16 %v568
        %v608 = vunpack.c.l.b16 %v569
        %v609 = vunpack.c.l.b16 %v570
        %v610 = vunpack.c.l.b16 %v571
        %v611 = vunpack.c.l.b16 %v572
        %v612 = vunpack.c.l.b16 %v573
        %v613 = vunpack.c.l.b16 %v574
        %v614 = vunpack.c.l.b16 %v575
        %v615 = vunpack.c.l.b16 %v576
        %v616 = vunpack.c.l.b16 %v577
        %v617 = vunpack.c.l.b16 %v578
        %v618 = vunpack.c.l.b16 %v579
        %v619 = vunpack.c.l.b16 %v580
        %v620 = vunpack.c.l.b16 %v581
        %v621 = vpack.c.b16 %v606, %v605
        %v622 = vpack.c.b16 %v608, %v607
        %v623 = vpack.c.b16 %v610, %v609
        %v624 = vpack.c.b16 %v612, %v611
        %v625 = vpack.c.b16 %v614, %v613
        %v626 = vpack.c.b16 %v616, %v615
        %v627 = vpack.c.b16 %v618, %v617
        %v628 = vpack.c.b16 %v620, %v619
        %637 = vmatprep.subr.bf16.mxu0 0
        %638 = vmatpush1.bf16.msra.mxu0 %v628
        %639 = vmatprep.subr.bf16.mxu0 0
        %640 = vmatpush1.bf16.msra.mxu0 %v627
        %641 = vmatprep.subr.bf16.mxu0 0
        %642 = vmatpush1.bf16.msra.mxu0 %v626
        %643 = vmatprep.subr.bf16.mxu0 0
        %644 = vmatpush1.bf16.msra.mxu0 %v625
        %645 = vmatprep.subr.bf16.mxu0 0
        %646 = vmatpush1.bf16.msra.mxu0 %v624
        %647 = vmatprep.subr.bf16.mxu0 0
        %648 = vmatpush1.bf16.msra.mxu0 %v623
        %649 = vmatprep.subr.bf16.mxu0 0
        %650 = vmatpush1.bf16.msra.mxu0 %v622
        %651 = vmatprep.subr.bf16.mxu0 0
        %652 = vmatpush1.bf16.msra.mxu0 %v621
        %653 = vmatprep.subr.bf16.mxu0 0
        %654 = vmatpush2.bf16.msra.mxu0 0
        %655 = vmatprep.subr.bf16.mxu0 0
        %656 = vmatpush2.bf16.msra.mxu0 0
        %657 = vmatprep.subr.bf16.mxu0 0
        %658 = vmatpush2.bf16.msra.mxu0 0
        %659 = vmatprep.subr.bf16.mxu0 0
        %660 = vmatpush2.bf16.msra.mxu0 0
        %661 = vmatprep.subr.bf16.mxu0 0
        %662 = vmatpush2.bf16.msra.mxu0 0
        %663 = vmatprep.subr.bf16.mxu0 0
        %664 = vmatpush2.bf16.msra.mxu0 0
        %665 = vmatprep.subr.bf16.mxu0 0
        %666 = vmatpush2.bf16.msra.mxu0 0
        %667 = vmatprep.subr.bf16.mxu0 0
        %668 = vmatpush2.bf16.msra.mxu0 0
        %669 = vmatprep.mubr.bf16.mxu0 0
        %670 = vmatmul.mubr.bf16.gmra.mxu0 %v565
        %v671 = vpop.f32.mrf.mxu0
        %v672 = vadd.f32 %v587, %v671
        %v673 = vpop.f32.mrf.mxu0
        %v674 = vpop.f32.mrf.mxu0
        %v675 = vpop.f32.mrf.mxu0
        %676 = vdwg.mxu0
        %v677 = vxor.u32 %v672, 2147483648
        %v678 = vmul.f32 %v677, 1.442695
        %v679 = vpow.pop %v678
        %v680 = vadd.f32 %v679, 1.0
        %v681 = vrcp.pop %v680
        %v682 = vmul.f32 1.0, %v681
        %v683 = vmul.f32 %v672, %v682
        %v684 = vld [vmem:[%s489] sm:$0xff]
        %v685 = vld [vmem:[%s489 + $0x8] sm:$0xff]
        %v686 = vxor.u32 %v684, 2147483648
        %v687 = vxor.u32 %v685, 2147483648
        %v688 = vmul.f32 %v686, 1.442695
        %v689 = vpow.pop %v688
        %v690 = vmul.f32 %v687, 1.442695
        %v691 = vpow.pop %v690
        %v692 = vadd.f32 %v689, 1.0
        %v693 = vadd.f32 %v691, 1.0
        %v694 = vrcp.pop %v692
        %v695 = vmul.f32 1.0, %v694
        %v696 = vrcp.pop %v693
        %v697 = vmul.f32 1.0, %v696
        %v698 = vmul.f32 %v684, %v695
        %v699 = vmul.f32 %v685, %v697
        %v700 = vld [vmem:[%s8] sm:$0x3]
        %v701 = vsub.f32 1.0, %v700
        %703 = vset.pattern.permute.xlu0 0
        %704 = vperm.xlu0 %703, %v564
        %v705 = vpop.permute.xlu0 %704
        %v708 = vlaneseq
        %v709 = vshrl.u32 %v708, 7
        %v710 = vsub.s32 0, %v709
        %v711 = vrot.slane %v700, %v710
        %v712 = vlaneseq
        %v713 = vshrl.u32 %v712, 7
        %v714 = vsub.s32 1, %v713
        %v715 = vrot.slane %v700, %v714
        %v718 = vmul.f32 %v705, %v711
        %v719 = vmul.f32 %v705, %v715
        %v721 = vlaneseq
        %v722 = vshrl.u32 %v721, 7
        %v723 = vsub.s32 0, %v722
        %v724 = vrot.slane %v701, %v723
        %v725 = vlaneseq
        %v726 = vshrl.u32 %v725, 7
        %v727 = vsub.s32 1, %v726
        %v728 = vrot.slane %v701, %v727
        %v731 = vadd.f32 %v724, %v718
        %v732 = vadd.f32 %v728, %v719
        %v733 = vmul.f32 %v698, %v731
        %v734 = vmul.f32 %v699, %v732
        %v735 = vpack.c.bf16 %v733, %v733
        %v736 = vpack.c.bf16 %v734, %v734
        %v737 = vld [vmem:[#allocation7] sm:$0xf]
        %v738 = vld [vmem:[#allocation7 + $0x4] sm:$0xf]
        %v739 = vld [vmem:[#allocation7 + $0x8] sm:$0xf]
        %v740 = vld [vmem:[#allocation7 + $0xc] sm:$0xf]
        %v741 = vld [vmem:[#allocation7 + $0x10] sm:$0xf]
        %v742 = vld [vmem:[#allocation7 + $0x14] sm:$0xf]
        %v743 = vld [vmem:[#allocation7 + $0x18] sm:$0xf]
        %v744 = vld [vmem:[#allocation7 + $0x1c] sm:$0xf]
        %v745 = vld [vmem:[#allocation7 + $0x20] sm:$0xf]
        %v746 = vld [vmem:[#allocation7 + $0x24] sm:$0xf]
        %v747 = vld [vmem:[#allocation7 + $0x28] sm:$0xf]
        %v748 = vld [vmem:[#allocation7 + $0x2c] sm:$0xf]
        %v749 = vld [vmem:[#allocation7 + $0x30] sm:$0xf]
        %v750 = vld [vmem:[#allocation7 + $0x34] sm:$0xf]
        %v751 = vld [vmem:[#allocation7 + $0x38] sm:$0xf]
        %v752 = vld [vmem:[#allocation7 + $0x3c] sm:$0xf]
        %v753 = vld [vmem:[#allocation7 + $0x40] sm:$0xf]
        %v754 = vld [vmem:[#allocation7 + $0x44] sm:$0xf]
        %v755 = vld [vmem:[#allocation7 + $0x48] sm:$0xf]
        %v756 = vld [vmem:[#allocation7 + $0x4c] sm:$0xf]
        %v757 = vld [vmem:[#allocation7 + $0x50] sm:$0xf]
        %v758 = vld [vmem:[#allocation7 + $0x54] sm:$0xf]
        %v759 = vld [vmem:[#allocation7 + $0x58] sm:$0xf]
        %v760 = vld [vmem:[#allocation7 + $0x5c] sm:$0xf]
        %v761 = vld [vmem:[#allocation7 + $0x60] sm:$0xf]
        %v762 = vld [vmem:[#allocation7 + $0x64] sm:$0xf]
        %v763 = vld [vmem:[#allocation7 + $0x68] sm:$0xf]
        %v764 = vld [vmem:[#allocation7 + $0x6c] sm:$0xf]
        %v765 = vld [vmem:[#allocation7 + $0x70] sm:$0xf]
        %v766 = vld [vmem:[#allocation7 + $0x74] sm:$0xf]
        %v767 = vld [vmem:[#allocation7 + $0x78] sm:$0xf]
        %v768 = vld [vmem:[#allocation7 + $0x7c] sm:$0xf]
        %v801 = vunpack.c.l.b16 %v737
        %v802 = vunpack.c.l.b16 %v738
        %v803 = vunpack.c.l.b16 %v739
        %v804 = vunpack.c.l.b16 %v740
        %v805 = vunpack.c.l.b16 %v741
        %v806 = vunpack.c.l.b16 %v742
        %v807 = vunpack.c.l.b16 %v743
        %v808 = vunpack.c.l.b16 %v744
        %v809 = vunpack.c.l.b16 %v745
        %v810 = vunpack.c.l.b16 %v746
        %v811 = vunpack.c.l.b16 %v747
        %v812 = vunpack.c.l.b16 %v748
        %v813 = vunpack.c.l.b16 %v749
        %v814 = vunpack.c.l.b16 %v750
        %v815 = vunpack.c.l.b16 %v751
        %v816 = vunpack.c.l.b16 %v752
        %v817 = vunpack.c.l.b16 %v753
        %v818 = vunpack.c.l.b16 %v754
        %v819 = vunpack.c.l.b16 %v755
        %v820 = vunpack.c.l.b16 %v756
        %v821 = vunpack.c.l.b16 %v757
        %v822 = vunpack.c.l.b16 %v758
        %v823 = vunpack.c.l.b16 %v759
        %v824 = vunpack.c.l.b16 %v760
        %v825 = vunpack.c.l.b16 %v761
        %v826 = vunpack.c.l.b16 %v762
        %v827 = vunpack.c.l.b16 %v763
        %v828 = vunpack.c.l.b16 %v764
        %v829 = vunpack.c.l.b16 %v765
        %v830 = vunpack.c.l.b16 %v766
        %v831 = vunpack.c.l.b16 %v767
        %v832 = vunpack.c.l.b16 %v768
        %v833 = vpack.c.b16 %v802, %v801
        %v834 = vpack.c.b16 %v804, %v803
        %v835 = vpack.c.b16 %v806, %v805
        %v836 = vpack.c.b16 %v808, %v807
        %v837 = vpack.c.b16 %v810, %v809
        %v838 = vpack.c.b16 %v812, %v811
        %v839 = vpack.c.b16 %v814, %v813
        %v840 = vpack.c.b16 %v816, %v815
        %v841 = vpack.c.b16 %v818, %v817
        %v842 = vpack.c.b16 %v820, %v819
        %v843 = vpack.c.b16 %v822, %v821
        %v844 = vpack.c.b16 %v824, %v823
        %v845 = vpack.c.b16 %v826, %v825
        %v846 = vpack.c.b16 %v828, %v827
        %v847 = vpack.c.b16 %v830, %v829
        %v848 = vpack.c.b16 %v832, %v831
        %865 = vmatprep.subr.bf16.mxu0 0
        %866 = vmatpush1.bf16.msra.mxu0 %v840
        %867 = vmatprep.subr.bf16.mxu0 0
        %868 = vmatpush1.bf16.msra.mxu0 %v839
        %869 = vmatprep.subr.bf16.mxu0 0
        %870 = vmatpush1.bf16.msra.mxu0 %v838
        %871 = vmatprep.subr.bf16.mxu0 0
        %872 = vmatpush1.bf16.msra.mxu0 %v837
        %873 = vmatprep.subr.bf16.mxu0 0
        %874 = vmatpush1.bf16.msra.mxu0 %v836
        %875 = vmatprep.subr.bf16.mxu0 0
        %876 = vmatpush1.bf16.msra.mxu0 %v835
        %877 = vmatprep.subr.bf16.mxu0 0
        %878 = vmatpush1.bf16.msra.mxu0 %v834
        %879 = vmatprep.subr.bf16.mxu0 0
        %880 = vmatpush1.bf16.msra.mxu0 %v833
        %881 = vmatprep.subr.bf16.mxu0 0
        %882 = vmatpush2.bf16.msra.mxu0 %v848
        %883 = vmatprep.subr.bf16.mxu0 0
        %884 = vmatpush2.bf16.msra.mxu0 %v847
        %885 = vmatprep.subr.bf16.mxu0 0
        %886 = vmatpush2.bf16.msra.mxu0 %v846
        %887 = vmatprep.subr.bf16.mxu0 0
        %888 = vmatpush2.bf16.msra.mxu0 %v845
        %889 = vmatprep.subr.bf16.mxu0 0
        %890 = vmatpush2.bf16.msra.mxu0 %v844
        %891 = vmatprep.subr.bf16.mxu0 0
        %892 = vmatpush2.bf16.msra.mxu0 %v843
        %893 = vmatprep.subr.bf16.mxu0 0
        %894 = vmatpush2.bf16.msra.mxu0 %v842
        %895 = vmatprep.subr.bf16.mxu0 0
        %896 = vmatpush2.bf16.msra.mxu0 %v841
        %897 = vmatprep.mubr.bf16.mxu0 %v736
        %898 = vmatmul.mubr.bf16.gmra.mxu0 %v735
        %v899 = vpop.f32.mrf.mxu0
        %v900 = vadd.f32 0.0, %v899
        %v901 = vpop.f32.mrf.mxu0
        %v902 = vpop.f32.mrf.mxu0
        %v903 = vpop.f32.mrf.mxu0
        %904 = vdwg.mxu0
        %v905 = vadd.f32 %v683, %v900
        %v906 = vld [vmem:[%s6] sm:$0x1]
        %v908 = vlaneseq
        %v909 = vshrl.u32 %v908, 7
        %v910 = vsub.s32 0, %v909
        %v911 = vrot.slane %v906, %v910
        %v913 = vadd.f32 %v905, %v911
        %v914 = vld [vmem:[%s7] sm:$0x1]
        %v916 = vlaneseq
        %v917 = vshrl.u32 %v916, 7
        %v918 = vsub.s32 0, %v917
        %v919 = vrot.slane %v914, %v918
        %v921 = vmul.f32 %v919, %v705
        %v922 = vadd.f32 %v913, %v921
        %v923 = vpack.c.bf16 %v922, %v922
        %v924 = vld [vmem:[#allocation8] sm:$0xf]
        %v925 = vld [vmem:[#allocation8 + $0x4] sm:$0xf]
        %v926 = vld [vmem:[#allocation8 + $0x8] sm:$0xf]
        %v927 = vld [vmem:[#allocation8 + $0xc] sm:$0xf]
        %v928 = vld [vmem:[#allocation8 + $0x10] sm:$0xf]
        %v929 = vld [vmem:[#allocation8 + $0x14] sm:$0xf]
        %v930 = vld [vmem:[#allocation8 + $0x18] sm:$0xf]
        %v931 = vld [vmem:[#allocation8 + $0x1c] sm:$0xf]
        %v932 = vld [vmem:[#allocation8 + $0x20] sm:$0xf]
        %v933 = vld [vmem:[#allocation8 + $0x24] sm:$0xf]
        %v934 = vld [vmem:[#allocation8 + $0x28] sm:$0xf]
        %v935 = vld [vmem:[#allocation8 + $0x2c] sm:$0xf]
        %v936 = vld [vmem:[#allocation8 + $0x30] sm:$0xf]
        %v937 = vld [vmem:[#allocation8 + $0x34] sm:$0xf]
        %v938 = vld [vmem:[#allocation8 + $0x38] sm:$0xf]
        %v939 = vld [vmem:[#allocation8 + $0x3c] sm:$0xf]
        %v940 = vld [vmem:[%s10] sm:$0x1]
        %v942 = vlaneseq
        %v943 = vshrl.u32 %v942, 7
        %v944 = vsub.s32 0, %v943
        %v945 = vrot.slane %v940, %v944
        %v963 = vunpack.c.l.b16 %v924
        %v964 = vunpack.c.l.b16 %v925
        %v965 = vunpack.c.l.b16 %v926
        %v966 = vunpack.c.l.b16 %v927
        %v967 = vunpack.c.l.b16 %v928
        %v968 = vunpack.c.l.b16 %v929
        %v969 = vunpack.c.l.b16 %v930
        %v970 = vunpack.c.l.b16 %v931
        %v971 = vunpack.c.l.b16 %v932
        %v972 = vunpack.c.l.b16 %v933
        %v973 = vunpack.c.l.b16 %v934
        %v974 = vunpack.c.l.b16 %v935
        %v975 = vunpack.c.l.b16 %v936
        %v976 = vunpack.c.l.b16 %v937
        %v977 = vunpack.c.l.b16 %v938
        %v978 = vunpack.c.l.b16 %v939
        %v979 = vpack.c.b16 %v964, %v963
        %v980 = vpack.c.b16 %v966, %v965
        %v981 = vpack.c.b16 %v968, %v967
        %v982 = vpack.c.b16 %v970, %v969
        %v983 = vpack.c.b16 %v972, %v971
        %v984 = vpack.c.b16 %v974, %v973
        %v985 = vpack.c.b16 %v976, %v975
        %v986 = vpack.c.b16 %v978, %v977
        %995 = vmatprep.subr.bf16.mxu0 0
        %996 = vmatpush1.bf16.msra.mxu0 %v986
        %997 = vmatprep.subr.bf16.mxu0 0
        %998 = vmatpush1.bf16.msra.mxu0 %v985
        %999 = vmatprep.subr.bf16.mxu0 0
        %1000 = vmatpush1.bf16.msra.mxu0 %v984
        %1001 = vmatprep.subr.bf16.mxu0 0
        %1002 = vmatpush1.bf16.msra.mxu0 %v983
        %1003 = vmatprep.subr.bf16.mxu0 0
        %1004 = vmatpush1.bf16.msra.mxu0 %v982
        %1005 = vmatprep.subr.bf16.mxu0 0
        %1006 = vmatpush1.bf16.msra.mxu0 %v981
        %1007 = vmatprep.subr.bf16.mxu0 0
        %1008 = vmatpush1.bf16.msra.mxu0 %v980
        %1009 = vmatprep.subr.bf16.mxu0 0
        %1010 = vmatpush1.bf16.msra.mxu0 %v979
        %1011 = vmatprep.subr.bf16.mxu0 0
        %1012 = vmatpush2.bf16.msra.mxu0 0
        %1013 = vmatprep.subr.bf16.mxu0 0
        %1014 = vmatpush2.bf16.msra.mxu0 0
        %1015 = vmatprep.subr.bf16.mxu0 0
        %1016 = vmatpush2.bf16.msra.mxu0 0
        %1017 = vmatprep.subr.bf16.mxu0 0
        %1018 = vmatpush2.bf16.msra.mxu0 0
        %1019 = vmatprep.subr.bf16.mxu0 0
        %1020 = vmatpush2.bf16.msra.mxu0 0
        %1021 = vmatprep.subr.bf16.mxu0 0
        %1022 = vmatpush2.bf16.msra.mxu0 0
        %1023 = vmatprep.subr.bf16.mxu0 0
        %1024 = vmatpush2.bf16.msra.mxu0 0
        %1025 = vmatprep.subr.bf16.mxu0 0
        %1026 = vmatpush2.bf16.msra.mxu0 0
        %1027 = vmatprep.mubr.bf16.mxu0 0
        %1028 = vmatmul.mubr.bf16.gmra.mxu0 %v923
        %v1029 = vpop.f32.mrf.mxu0
        %v1030 = vadd.f32 %v945, %v1029
        %v1031 = vpop.f32.mrf.mxu0
        %v1032 = vpop.f32.mrf.mxu0
        %v1033 = vpop.f32.mrf.mxu0
        %1034 = vdwg.mxu0
        %v1035 = vadd.f32 %v1030, %v563
        %1036 = vadd.xlane.f32.xlu0 %v1035
        %v1037 = vpop.xlane.xlu0 %1036
        %v1038 = vmul.f32 %v1037, 0.03125
        %v1039 = vsub.f32 %v1035, %v1038
        %v1040 = vld [vmem:[%s13] sm:$0x1]
        %v1042 = vlaneseq
        %v1043 = vshrl.u32 %v1042, 7
        %v1044 = vsub.s32 0, %v1043
        %v1045 = vrot.slane %v1040, %v1044
        %v1047 = vmul.f32 %v1039, %v1045
        %v1048 = vmul.f32 %v1047, %v1047
        %1049 = vadd.xlane.f32.xlu0 %v1048
        %v1050 = vpop.xlane.xlu0 %1049
        %v1051 = vmul.f32 %v1050, 0.03125
        %v1052 = vadd.f32 %v1051, 1e-06
        %v1053 = vrsqrt.pop %v1052
        %v1054 = vmul.f32 %v1047, %v1053
        %v1055 = vld [vmem:[%s11] sm:$0x1]
        %v1057 = vlaneseq
        %v1058 = vshrl.u32 %v1057, 7
        %v1059 = vsub.s32 0, %v1058
        %v1060 = vrot.slane %v1055, %v1059
        %v1062 = vmul.f32 %v1054, %v1060
        %v1063 = vld [vmem:[%s12] sm:$0x1]
        %v1065 = vlaneseq
        %v1066 = vshrl.u32 %v1065, 7
        %v1067 = vsub.s32 0, %v1066
        %v1068 = vrot.slane %v1063, %v1067
        %v1070 = vadd.f32 %v1062, %v1068
        %1071 = vst [vmem:[%s553] sm:$0xff] %v1070
        %s1072 = sand.u32 %s350, 1
        %s1073 = scalar_lea.sflag [#allocation4], %s1072
        %s1074 = sand.u32 %s350, 1
        %s1075 = smul.addr %s1074, 8
        %s1076 = scalar_lea.vmem [#allocation10], %s1075
        // Predicated region
        $region93: #{tpu_custom_call.1} parent=75 // pred_check
          %p1077 = pneg %p360
        $region94: #{tpu_custom_call.1} parent=75 // pred_check_branch
          %1079 = sbr.rel (%p1077) target = $region96
        $region95: #{tpu_custom_call.1} parent=75 // pred_region
          %s1081 = ssub.s32 128, 128
          %1082 = vsyncadd %s1073, %s1081
          %s1083 = smul.addr %s33, 128
          %s1084 = scalar_lea.hbm %s14, %s1083
          %s1086 = sshll.u32 %s1076, 4
          %s1087 = int_to_ptr.vmem [resolvable:$true] %s1086
          %1089 = dma.vmem_to_hbm [thread:$0]  %s1087, 128, %s1084, %s1073
        $region96: #{tpu_custom_call.1} parent=75 // pred_fallthru
          _
      $region76: #{tpu_custom_call.1} parent=5 // pred_fallthru
        _
      %p1090 = scmp.le.s32.totalorder 2, %s28
      // Predicated region
      $region97: #{tpu_custom_call.1} parent=5 // pred_check
        %p1091 = pneg %p1090
      $region98: #{tpu_custom_call.1} parent=5 // pred_check_branch
        %1093 = sbr.rel (%p1091) target = $region100
      $region99: #{tpu_custom_call.1} parent=5 // pred_region
        %s1094 = ssub.s32 %s28, 2
        // Predicated region
        $region101: #{tpu_custom_call.1} parent=99 // pred_check
          %p1095 = pneg %p366
        $region102: #{tpu_custom_call.1} parent=99 // pred_check_branch
          %1097 = sbr.rel (%p1095) target = $region104
        $region103: #{tpu_custom_call.1} parent=99 // pred_region
          %s1098 = sand.u32 %s351, 1
          %s1099 = scalar_lea.sflag [#allocation4], %s1098
          %s1100 = sand.u32 %s351, 1
          %s1101 = smul.addr %s1100, 8
          %s1102 = scalar_lea.vmem [#allocation10], %s1101
          %1103 = dma.done %s1099, 128
        $region104: #{tpu_custom_call.1} parent=99 // pred_fallthru
          _
      $region100: #{tpu_custom_call.1} parent=5 // pred_fallthru
        _
    $region6: #{tpu_custom_call.1} parent=1 // loop_footer
      %s32 = sadd.s32 1, %s28
    $region7: #{tpu_custom_call.1} parent=1 // loop_footer_branch
      %27 = sbr.rel target = $region3
    $region8: #{tpu_custom_call.1} parent=1 // loop_exit
      _
    %1104 = vsyncpa [#allocation3], 1
    %s1105 = scalar_lea.sflag [#allocation3], 1
    %1106 = vsyncpa %s1105, 1
    %1107 = vsyncpa [#allocation6], 1
    %1108 = vsyncpa [#allocation9], 1
    %1109 = vsyncpa [#allocation4], 1
    %s1110 = scalar_lea.sflag [#allocation4], 1
    %1111 = vsyncpa %s1110, 1

</llo_original>
